<compile_context>
chip_gen: v6e
topology: v6e:2x2x1
jax: 0.10.0
libtpu: 0.0.40
codegen_flags: <defaults>
</compile_context>

<pallas_src>
import jax
import jax.numpy as jnp
from jax.experimental import pallas as pl
from jax.experimental.pallas import tpu as pltpu

ALPHA = 0.25
GAMMA = 2.0  # hard-coded as an explicit square inside the kernel (module default)


def _round_up(x, m):
    return (x + m - 1) // m * m


def _num_tensorcores():
    """Best-effort TensorCore count; any failure falls back to 2 (harmless:
    on 1-TC chips an extra 'parallel' slice is just one more tiny partial)."""
    try:
        info = pltpu.get_tpu_info()
        for name in ("num_tensorcores", "tensorcores_per_chip",
                     "num_cores_per_chip", "num_cores", "core_count"):
            v = getattr(info, name, None)
            if isinstance(v, int) and v >= 1:
                return int(v)
    except Exception:
        pass
    return 2


def _make_kernel(bt, C, n_inner, b_true, ragged):
    def accumulate(out_ref, loss):
        if bt % 8 == 0:
            # Sublane-group fold: pure element-wise VPU adds into (8, C).
            out_ref[...] += jnp.sum(loss.reshape(bt // 8, 8, C), axis=0)
        else:
            # Only reachable when B < 8 (single tiny full-dim block).
            out_ref[0:1, :] += jnp.sum(loss, axis=0, keepdims=True)

    def kernel(preds_ref, targets_ref, out_ref):
        s = pl.program_id(0)
        i = pl.program_id(1)

        # Zero this slice's partial-sum block on its first inner step.
        @pl.when(i == 0)
        def _():
            out_ref[...] = jnp.zeros_like(out_ref)

        x = preds_ref[...].astype(jnp.float32)
        t = targets_ref[...].astype(jnp.float32)

        # One EUP exp shared between stable BCE-with-logits and sigmoid:
        #   bce = max(x, 0) - x*t + log1p(exp(-|x|))
        #   sigmoid(x) = where(x >= 0, 1, e) / (1 + e),  e = exp(-|x|)
        e = jnp.exp(-jnp.abs(x))
        bce = jnp.maximum(x, 0.0) - x * t + jnp.log1p(e)
        p = jnp.where(x >= 0.0, 1.0, e) / (1.0 + e)
        q = 1.0 - p

        # gamma == 2 -> explicit squares; factor bce out of the focal weight.
        loss = bce * (t * ALPHA * (q * q) + (1.0 - t) * (p * p))

        if ragged:
            row0 = (s * n_inner + i) * bt

            # Fast path: block fully inside the batch -> no mask at all.
            @pl.when(row0 + bt <= b_true)
            def _():
                accumulate(out_ref, loss)

            # Boundary (or phantom) block: select-mask the padded rows.
            @pl.when(row0 + bt > b_true)
            def _():
                ridx = row0 + jax.lax.broadcasted_iota(jnp.int32, (bt, 1), 0)
                accumulate(out_ref, jnp.where(ridx < b_true, loss, 0.0))
        else:
            accumulate(out_ref, loss)

    return kernel


def bce_focal_loss(preds, targets, *, row_tile=1024):
    assert preds.shape == targets.shape and preds.ndim == 2
    B, C = preds.shape

    # --- Tile-size / grid derivation (no input padding) -------------------
    # Budget the row tile against the f32 compute footprint (4 B/elem) so the
    # in-kernel f32 temporaries stay bounded regardless of the input dtype.
    max_tile_bytes = 2 * 1024 * 1024
    bt_cap = max(8, (max_tile_bytes // (C * 4)) // 8 * 8)
    row_cap = max(8, min(_round_up(row_tile, 8), bt_cap))

    cores = _num_tensorcores()
    # Only split when each slice gets a reasonable amount of real work.
    n_split = max(1, min(cores, B // 32))
    # Balance: pick the number of blocks first, then size bt to just cover B,
    # so both slices get nearly equal real rows and no slice is mostly padding.
    target_blocks = n_split * max(1, pl.cdiv(pl.cdiv(B, n_split), row_cap))
    bt = max(8, _round_up(pl.cdiv(B, target_blocks), 8))
    if B >= 8:
        bt = min(bt, (B // 8) * 8)   # never larger than the array's row extent
    else:
        bt = B                       # full-dim block for tiny batches

    nb_real = pl.cdiv(B, bt)         # blocks that contain real data
    n_split = max(1, min(n_split, nb_real))
    n_inner = pl.cdiv(nb_real, n_split)
    n_total = n_split * n_inner      # logical blocks (>= nb_real)
    ragged = n_total * bt > B        # any rows past the end of the batch?

    last_block = nb_real - 1
    if n_total > nb_real:
        # Phantom blocks (grid rectangularization) re-read the last real
        # block; the kernel masks their contribution to exactly zero.
        def in_map(s, i):
            return (jnp.minimum(s * n_inner + i, last_block), 0)
    else:
        def in_map(s, i):
            return (s * n_inner + i, 0)

    # --- Explicit VMEM budget ---------------------------------------------
    p_isz = jnp.dtype(preds.dtype).itemsize
    t_isz = jnp.dtype(targets.dtype).itemsize
    elem = bt * C
    need = (2 * elem * (p_isz + t_isz)    # double-buffered input tiles
            + 8 * elem * 4                # generous bound on f32 temporaries
            + 2 * 8 * C * 4               # (8, C) f32 output block buffers
            + (2 << 20))                  # headroom for Mosaic scratch
    vmem_limit = int(min(max(need, 8 << 20), 32 << 20))  # safe on v5e/v6e/v7x

    kernel = _make_kernel(bt, C, n_inner, B, ragged)

    partials = pl.pallas_call(
        kernel,
        out_shape=jax.ShapeDtypeStruct((n_split, 8, C), jnp.float32),
        grid_spec=pltpu.PrefetchScalarGridSpec(
            num_scalar_prefetch=0,
            grid=(n_split, n_inner),
            in_specs=[
                pl.BlockSpec((bt, C), in_map),
                pl.BlockSpec((bt, C), in_map),
            ],
            # Squeezed leading dim: kernel sees an (8, C) partial-sum block
            # that stays resident across the inner ("arbitrary") axis.
            out_specs=pl.BlockSpec((None, 8, C), lambda s, i: (s, 0, 0)),
        ),
        compiler_params=pltpu.CompilerParams(
            dimension_semantics=("parallel", "arbitrary"),
            vmem_limit_bytes=vmem_limit,
        ),
    )(preds, targets)

    # Single final cross-lane/cross-slice reduction + mean over the true B*C.
    return jnp.sum(partials) / jnp.float32(B * C)


def bce_focal_loss_ref(preds, targets, alpha=ALPHA, gamma=GAMMA):
    x = preds.astype(jnp.float32)
    t = targets.astype(jnp.float32)
    bce = jnp.maximum(x, 0.0) - x * t + jnp.log1p(jnp.exp(-jnp.abs(x)))
    p = jax.nn.sigmoid(x)
    loss = t * alpha * (1.0 - p) ** gamma * bce + (1.0 - t) * p ** gamma * bce
    return jnp.mean(loss)


if __name__ == "__main__":
    key = jax.random.PRNGKey(0)
    k1, k2, k3, k4, k5, k6 = jax.random.split(key, 6)

    # Case 1: lane-aligned (batch, num_classes), single block, unmasked path.
    B, C = 16, 128
    preds = jax.random.normal(k1, (B, C), dtype=jnp.float32) * 2.0
    targets = (jax.random.uniform(k2, (B, C)) > 0.9).astype(jnp.float32)
    loss = bce_focal_loss(preds, targets)
    jax.block_until_ready(loss)
    ref = bce_focal_loss_ref(preds, targets)
    assert jnp.allclose(loss, ref, rtol=1e-5, atol=1e-6), (loss, ref)

    # Case 2: ragged batch / non-multiple-of-128 class count (BirdCLEF-like):
    # exercises the no-pad boundary block + select-mask path.
    B2, C2 = 12, 200
    preds2 = jax.random.normal(k3, (B2, C2), dtype=jnp.float32) * 2.0
    targets2 = (jax.random.uniform(k4, (B2, C2)) > 0.9).astype(jnp.float32)
    loss2 = bce_focal_loss(preds2, targets2)
    jax.block_until_ready(loss2)
    ref2 = bce_focal_loss_ref(preds2, targets2)
    assert jnp.allclose(loss2, ref2, rtol=1e-5, atol=1e-6), (loss2, ref2)

    # Case 3: larger batch that splits across the "parallel" axis (both TCs
    # on v7x), balanced bt = cdiv(B, n_split) rounded to 8.
    B3, C3 = 96, 128
    preds3 = jax.random.normal(k5, (B3, C3), dtype=jnp.float32) * 2.0
    targets3 = (jax.random.uniform(k6, (B3, C3)) > 0.9).astype(jnp.float32)
    loss3 = bce_focal_loss(preds3, targets3)
    jax.block_until_ready(loss3)
    ref3 = bce_focal_loss_ref(preds3, targets3)
    assert jnp.allclose(loss3, ref3, rtol=1e-5, atol=1e-6), (loss3, ref3)

    print("KERNEL_OK")
</pallas_src>

<mosaic_0001>
module attributes {stable_mosaic.version = 11 : i64} {
  func.func @kernel(%arg0: i32, %arg1: i32, %arg2: memref<16x128xf32, #tpu.memory_space<vmem>>, %arg3: memref<16x128xf32, #tpu.memory_space<vmem>>, %arg4: memref<1x8x128xf32, #tpu.memory_space<vmem>>) attributes {dimension_semantics = [#tpu.dimension_semantics<parallel>, #tpu.dimension_semantics<arbitrary>], iteration_bounds = array<i64: 1, 1>, scalar_prefetch = 0 : i64, scratch_operands = 0 : i64, tpu.core_type = #tpu.core_type<tc>, window_params = [{transform_indices = @transform_0, window_bounds = array<i64: 16, 128>}, {transform_indices = @transform_1, window_bounds = array<i64: 16, 128>}, {transform_indices = @transform_2, window_bounds = array<i64: 1, 8, 128>}]} {
    %c0_i32 = arith.constant 0 : i32
    %0 = arith.cmpi eq, %arg1, %c0_i32 : i32
    %1 = arith.extui %0 : i1 to i32
    %c0_i32_0 = arith.constant 0 : i32
    %2 = arith.cmpi ne, %1, %c0_i32_0 : i32
    scf.if %2 {
      %cst_18 = arith.constant 0.000000e+00 : f32
      %42 = vector.broadcast %cst_18 : f32 to vector<8x128xf32>
      %c0_19 = arith.constant 0 : index
      %c0_20 = arith.constant 0 : index
      %c0_21 = arith.constant 0 : index
      %43 = vector.load %arg4[%c0_19, %c0_20, %c0_21] : memref<1x8x128xf32, #tpu.memory_space<vmem>>, vector<1x8x128xf32>
      %44 = vector.shape_cast %43 : vector<1x8x128xf32> to vector<8x128xf32>
      %45 = vector.shape_cast %42 : vector<8x128xf32> to vector<1x8x128xf32>
      tpu.vector_store %arg4[%c0_19, %c0_20, %c0_21], %45 {strides = array<i32>} : memref<1x8x128xf32, #tpu.memory_space<vmem>>, vector<1x8x128xf32>,
    } else {
    }
    %c0 = arith.constant 0 : index
    %c0_1 = arith.constant 0 : index
    %3 = vector.load %arg2[%c0, %c0_1] : memref<16x128xf32, #tpu.memory_space<vmem>>, vector<16x128xf32>
    %c0_2 = arith.constant 0 : index
    %c0_3 = arith.constant 0 : index
    %4 = vector.load %arg3[%c0_2, %c0_3] : memref<16x128xf32, #tpu.memory_space<vmem>>, vector<16x128xf32>
    %5 = math.absf %3 : vector<16x128xf32>
    %cst = arith.constant 0.000000e+00 : f32
    %6 = vector.broadcast %cst : f32 to vector<16x128xf32>
    %7 = arith.subf %6, %5 : vector<16x128xf32>
    %8 = math.exp %7 : vector<16x128xf32>
    %cst_4 = arith.constant 0.000000e+00 : f32
    %9 = vector.broadcast %cst_4 : f32 to vector<16x128xf32>
    %10 = arith.maximumf %3, %9 : vector<16x128xf32>
    %11 = arith.mulf %3, %4 : vector<16x128xf32>
    %12 = arith.subf %10, %11 : vector<16x128xf32>
    %13 = math.log1p %8 : vector<16x128xf32>
    %14 = arith.addf %12, %13 : vector<16x128xf32>
    %cst_5 = arith.constant 0.000000e+00 : f32
    %15 = vector.broadcast %cst_5 : f32 to vector<16x128xf32>
    %16 = arith.cmpf oge, %3, %15 : vector<16x128xf32>
    %cst_6 = arith.constant 1.000000e+00 : f32
    %17 = vector.broadcast %cst_6 : f32 to vector<16x128xf32>
    %18 = arith.select %16, %17, %8 : vector<16x128xi1>, vector<16x128xf32>
    %cst_7 = arith.constant 1.000000e+00 : f32
    %19 = vector.broadcast %cst_7 : f32 to vector<16x128xf32>
    %20 = arith.addf %19, %8 : vector<16x128xf32>
    %21 = arith.divf %18, %20 : vector<16x128xf32>
    %cst_8 = arith.constant 1.000000e+00 : f32
    %22 = vector.broadcast %cst_8 : f32 to vector<16x128xf32>
    %23 = arith.subf %22, %21 : vector<16x128xf32>
    %cst_9 = arith.constant 2.500000e-01 : f32
    %24 = vector.broadcast %cst_9 : f32 to vector<16x128xf32>
    %25 = arith.mulf %4, %24 : vector<16x128xf32>
    %26 = arith.mulf %23, %23 : vector<16x128xf32>
    %27 = arith.mulf %25, %26 : vector<16x128xf32>
    %cst_10 = arith.constant 1.000000e+00 : f32
    %28 = vector.broadcast %cst_10 : f32 to vector<16x128xf32>
    %29 = arith.subf %28, %4 : vector<16x128xf32>
    %30 = arith.mulf %21, %21 : vector<16x128xf32>
    %31 = arith.mulf %29, %30 : vector<16x128xf32>
    %32 = arith.addf %27, %31 : vector<16x128xf32>
    %33 = arith.mulf %14, %32 : vector<16x128xf32>
    %c0_11 = arith.constant 0 : index
    %c0_12 = arith.constant 0 : index
    %c0_13 = arith.constant 0 : index
    %34 = vector.load %arg4[%c0_11, %c0_12, %c0_13] : memref<1x8x128xf32, #tpu.memory_space<vmem>>, vector<1x8x128xf32>
    %35 = vector.shape_cast %34 : vector<1x8x128xf32> to vector<8x128xf32>
    %36 = vector.shape_cast %33 : vector<16x128xf32> to vector<2x8x128xf32>
    %cst_14 = arith.constant dense<0.000000e+00> : vector<8x128xf32>
    %37 = vector.multi_reduction <add>, %36, %cst_14 [0] : vector<2x8x128xf32> to vector<8x128xf32>
    %38 = arith.addf %35, %37 : vector<8x128xf32>
    %c0_15 = arith.constant 0 : index
    %c0_16 = arith.constant 0 : index
    %c0_17 = arith.constant 0 : index
    %39 = vector.load %arg4[%c0_15, %c0_16, %c0_17] : memref<1x8x128xf32, #tpu.memory_space<vmem>>, vector<1x8x128xf32>
    %40 = vector.shape_cast %39 : vector<1x8x128xf32> to vector<8x128xf32>
    %41 = vector.shape_cast %38 : vector<8x128xf32> to vector<1x8x128xf32>
    tpu.vector_store %arg4[%c0_15, %c0_16, %c0_17], %41 {strides = array<i32>} : memref<1x8x128xf32, #tpu.memory_space<vmem>>, vector<1x8x128xf32>,
    return
  }
  func.func @transform_0(%arg0: i32, %arg1: i32) -> (i32, i32) {
    %c1_i32 = arith.constant 1 : i32
    %0 = arith.muli %arg0, %c1_i32 : i32
    %1 = arith.addi %0, %arg1 : i32
    %c0_i32 = arith.constant 0 : i32
    %c0_i32_0 = arith.constant 0 : i32
    return %1, %c0_i32 : i32, i32
  }
  func.func @transform_1(%arg0: i32, %arg1: i32) -> (i32, i32) {
    %c1_i32 = arith.constant 1 : i32
    %0 = arith.muli %arg0, %c1_i32 : i32
    %1 = arith.addi %0, %arg1 : i32
    %c0_i32 = arith.constant 0 : i32
    %c0_i32_0 = arith.constant 0 : i32
    return %1, %c0_i32 : i32, i32
  }
  func.func @transform_2(%arg0: i32, %arg1: i32) -> (i32, i32, i32) {
    %c0_i32 = arith.constant 0 : i32
    %c0_i32_0 = arith.constant 0 : i32
    %c0_i32_1 = arith.constant 0 : i32
    return %arg0, %c0_i32, %c0_i32_0 : i32, i32, i32
  }
}

</mosaic_0001>

<llo_original>
// kernel: tpu_custom_call.1
$region0: #{tpu_custom_call.1}
  #allocation0 [shape = 'u32[]', space=smem, size = 0x4, offset = 0x4, fixed_abs, tag = 'smem constant byte address 0x4 - core index']
  #allocation1 [shape = 'u32[144,128]{1,0:T(1,128)}', space=vmem, size = 0x12000, scoped, tag = 'internal scratch']
  %s0 = inlined_call_operand.hbm [shape: f32[16,128], index: 0, kind: input, shape index: {}]
  %s1 = inlined_call_operand.hbm [shape: f32[16,128], index: 1, kind: input, shape index: {}]
  %s2 = inlined_call_operand.hbm [shape: f32[1,8,128], index: 2, kind: output, shape index: {}]
  %s3 = sld [smem:[#allocation0]]
  $region30: #{tpu_custom_call.1} parent=0
    _
  %s5 = ssub.s32 1, %s3
  %s6 = scalar_select 0, %s5, %s3
  $region1: #{tpu_custom_call.1} parent=0
    #allocation2 [shape = 'u8[8192]{0}', space=vmem, size = 0x2000, scoped, tag = 'input window, operand 0, single buffered']
    #allocation3 [shape = 's32[1]{0}', space=sflag, size = 0x4, scoped, tag = 'scoped memory for tpu_custom_call.1']
    #allocation4 [shape = 's32[1]{0}', space=sflag, size = 0x4, scoped, tag = 'scoped memory for tpu_custom_call.1']
    #allocation5 [shape = 'u8[8192]{0}', space=vmem, size = 0x2000, scoped, tag = 'input window, operand 1, single buffered']
    #allocation6 [shape = 's32[1]{0}', space=sflag, size = 0x4, scoped, tag = 'scoped memory for tpu_custom_call.1']
    #allocation7 [shape = 'u8[4096]{0}', space=vmem, size = 0x1000, scoped, tag = 'output window, operand 0, single buffered']
    %7 = vsyncpa [#allocation3], 0
    %8 = vsyncpa [#allocation6], 0
    %9 = vsyncpa [#allocation4], 0
    // Predicated region
    $region2: #{tpu_custom_call.1} parent=1 // pred_check
      _
    $region3: #{tpu_custom_call.1} parent=1 // pred_check_branch
      %11 = sbr.rel (0) target = $region5
    $region4: #{tpu_custom_call.1} parent=1 // pred_region
      %s12 = sadd.s32 0, 0
      %s13 = smul.u32 2, %s12
      %s15 = ssub.s32 256, 256
      %16 = vsyncadd [#allocation3], %s15
      %s17 = smul.addr %s13, 128
      %s18 = scalar_lea.hbm %s0, %s17
      %s19 = sshll.u32 [#allocation2], 4
      %s20 = int_to_ptr.vmem [resolvable:$true] %s19
      %25 = dma.hbm_to_vmem [thread:$0]  %s18, 256, %s20, [#allocation3], 128, 128, 8
    $region5: #{tpu_custom_call.1} parent=1 // pred_fallthru
      _
    // Predicated region
    $region6: #{tpu_custom_call.1} parent=1 // pred_check
      _
    $region7: #{tpu_custom_call.1} parent=1 // pred_check_branch
      %27 = sbr.rel (0) target = $region9
    $region8: #{tpu_custom_call.1} parent=1 // pred_region
      %s28 = sadd.s32 0, 0
      %s29 = smul.u32 2, %s28
      %s31 = ssub.s32 256, 256
      %32 = vsyncadd [#allocation6], %s31
      %s33 = smul.addr %s29, 128
      %s34 = scalar_lea.hbm %s1, %s33
      %s35 = sshll.u32 [#allocation5], 4
      %s36 = int_to_ptr.vmem [resolvable:$true] %s35
      %41 = dma.hbm_to_vmem [thread:$0]  %s34, 256, %s36, [#allocation6], 128, 128, 8
    $region9: #{tpu_custom_call.1} parent=1 // pred_fallthru
      _
    // Predicated region
    $region10: #{tpu_custom_call.1} parent=1 // pred_check
      _
    $region11: #{tpu_custom_call.1} parent=1 // pred_check_branch
      %43 = sbr.rel (0) target = $region13
    $region12: #{tpu_custom_call.1} parent=1 // pred_region
      %44 = dma.done [#allocation3], 256
    $region13: #{tpu_custom_call.1} parent=1 // pred_fallthru
      _
    // Predicated region
    $region14: #{tpu_custom_call.1} parent=1 // pred_check
      _
    $region15: #{tpu_custom_call.1} parent=1 // pred_check_branch
      %46 = sbr.rel (0) target = $region17
    $region16: #{tpu_custom_call.1} parent=1 // pred_region
      %47 = dma.done [#allocation6], 256
    $region17: #{tpu_custom_call.1} parent=1 // pred_fallthru
      _
    %s48 = sadd.s32 0, 0
    %s49 = smul.u32 2, %s48
    %s50 = sadd.s32 0, 0
    %s51 = smul.u32 2, %s50
    %p52 = scmp.eq.s32.totalorder 0, 0
    // Predicated region
    $region18: #{tpu_custom_call.1} parent=1 // pred_check
      %p53 = pneg %p52
    $region19: #{tpu_custom_call.1} parent=1 // pred_check_branch
      %55 = sbr.rel (%p53) target = $region21
    $region20: #{tpu_custom_call.1} parent=1 // pred_region
      %56 = vst [vmem:[#allocation7] sm:$0xff] 0.0
    $region21: #{tpu_custom_call.1} parent=1 // pred_fallthru
      _
    %v57 = vld [vmem:[#allocation2] sm:$0xff]
    %v58 = vld [vmem:[#allocation2 + $0x8] sm:$0xff]
    %v59 = vld [vmem:[#allocation5] sm:$0xff]
    %v60 = vld [vmem:[#allocation5 + $0x8] sm:$0xff]
    %v61 = vand.u32 2147483647, %v57
    %v62 = vand.u32 2147483647, %v58
    %v63 = vsub.f32 0.0, %v61
    %v64 = vsub.f32 0.0, %v62
    %v65 = vmul.f32 %v63, 1.442695
    %v66 = vpow.pop %v65
    %v67 = vmul.f32 %v64, 1.442695
    %v68 = vpow.pop %v67
    %v69 = vmax.f32 %v57, 0.0
    %v70 = vmax.f32 %v58, 0.0
    %v71 = vmul.f32 %v57, %v59
    %v72 = vmul.f32 %v58, %v60
    %v73 = vsub.f32 %v69, %v71
    %v74 = vsub.f32 %v70, %v72
    %v75 = vadd.f32 %v66, 1.0
    %v76 = vlog2.pop %v75
    %v77 = vmul.f32 %v76, 0.6931472
    %v78 = vmul.f32 -0.5, %v66
    %v79 = vadd.f32 %v78, 1.0
    %v80 = vmul.f32 %v79, %v66
    %v81 = vand.u32 2147483647, %v66
    %vm82 = vcmp.lt.f32.partialorder %v81, 0.0004427343
    %v83 = vsel %vm82, %v80, %v77
    %v84 = vadd.f32 %v68, 1.0
    %v85 = vlog2.pop %v84
    %v86 = vmul.f32 %v85, 0.6931472
    %v87 = vmul.f32 -0.5, %v68
    %v88 = vadd.f32 %v87, 1.0
    %v89 = vmul.f32 %v88, %v68
    %v90 = vand.u32 2147483647, %v68
    %vm91 = vcmp.lt.f32.partialorder %v90, 0.0004427343
    %v92 = vsel %vm91, %v89, %v86
    %v93 = vadd.f32 %v73, %v83
    %v94 = vadd.f32 %v74, %v92
    %vm95 = vcmp.ge.f32.partialorder %v57, 0.0
    %vm96 = vcmp.ge.f32.partialorder %v58, 0.0
    %v97 = vsel %vm95, 1.0, %v66
    %v98 = vsel %vm96, 1.0, %v68
    %v99 = vadd.f32 %v66, 1.0
    %v100 = vadd.f32 %v68, 1.0
    %v101 = vrcp.pop %v99
    %v102 = vmul.f32 %v97, %v101
    %v103 = vrcp.pop %v100
    %v104 = vmul.f32 %v98, %v103
    %v105 = vsub.f32 1.0, %v102
    %v106 = vsub.f32 1.0, %v104
    %v107 = vmul.f32 %v59, 0.25
    %v108 = vmul.f32 %v60, 0.25
    %v109 = vmul.f32 %v105, %v105
    %v110 = vmul.f32 %v106, %v106
    %v111 = vmul.f32 %v107, %v109
    %v112 = vmul.f32 %v108, %v110
    %v113 = vsub.f32 1.0, %v59
    %v114 = vsub.f32 1.0, %v60
    %v115 = vmul.f32 %v102, %v102
    %v116 = vmul.f32 %v104, %v104
    %v117 = vmul.f32 %v113, %v115
    %v118 = vmul.f32 %v114, %v116
    %v119 = vadd.f32 %v111, %v117
    %v120 = vadd.f32 %v112, %v118
    %v121 = vmul.f32 %v93, %v119
    %v122 = vmul.f32 %v94, %v120
    %v123 = vld [vmem:[#allocation7] sm:$0xff]
    %v124 = vadd.f32 %v121, %v122
    %v125 = vadd.f32 %v123, %v124
    %126 = vst [vmem:[#allocation7] sm:$0xff] %v125
    // Predicated region
    $region22: #{tpu_custom_call.1} parent=1 // pred_check
      _
    $region23: #{tpu_custom_call.1} parent=1 // pred_check_branch
      %128 = sbr.rel (0) target = $region25
    $region24: #{tpu_custom_call.1} parent=1 // pred_region
      %s130 = ssub.s32 128, 128
      %131 = vsyncadd [#allocation4], %s130
      %s133 = sshll.u32 [#allocation7], 4
      %s134 = int_to_ptr.vmem [resolvable:$true] %s133
      %136 = dma.vmem_to_hbm [thread:$0]  %s134, 128, %s2, [#allocation4]
    $region25: #{tpu_custom_call.1} parent=1 // pred_fallthru
      _
    // Predicated region
    $region26: #{tpu_custom_call.1} parent=1 // pred_check
      _
    $region27: #{tpu_custom_call.1} parent=1 // pred_check_branch
      %138 = sbr.rel (0) target = $region29
    $region28: #{tpu_custom_call.1} parent=1 // pred_region
      %139 = dma.done [#allocation4], 128
    $region29: #{tpu_custom_call.1} parent=1 // pred_fallthru
      _
    %140 = vsyncpa [#allocation3], 1
    %141 = vsyncpa [#allocation6], 1
    %142 = vsyncpa [#allocation4], 1

</llo_original>
